<compile_context>
chip_gen: v7x
topology: tpu7x:2x2x1
jax: 0.10.0
libtpu: 0.0.40
codegen_flags: <defaults>
</compile_context>

<pallas_src>
import jax
import jax.numpy as jnp
from jax import lax
from jax.experimental import pallas as pl
from jax.experimental.pallas import tpu as pltpu

N_EMBD = 128          # C (lane dimension)
BLOCK_SIZE = 64       # max T
HEAD_SIZE = 32        # head_size = n_embd // n_head (n_head = 4 in the GPT)
DROPOUT_P = 0.15      # eval-mode identity (see TODO above)


def head_kernel(x_ref, wqkv_ref, o_ref):
    """One grid step: causal single-head attention for Bblk whole sequences."""
    x = x_ref[...]                          # (Bblk, T, C) f32
    Bb, T, C = x.shape
    hs = o_ref.shape[-1]

    # ---- fused Q/K/V projection on flattened rows (M = Bblk*T) ------------
    # bf16 MXU operands, f32 accumulation.
    hflat = x.reshape(Bb * T, C).astype(jnp.bfloat16)
    wqkv = wqkv_ref[...]                    # (C, 3*hs) bf16
    qkv = jnp.dot(hflat, wqkv, preferred_element_type=jnp.float32)  # (Bb*T, 3*hs)

    q = qkv[:, 0 * hs:1 * hs].reshape(Bb, T, hs).astype(jnp.bfloat16)
    k = qkv[:, 1 * hs:2 * hs].reshape(Bb, T, hs).astype(jnp.bfloat16)
    v = qkv[:, 2 * hs:3 * hs].reshape(Bb, T, hs).astype(jnp.bfloat16)

    # ---- causal scores: contraction on last dim, no explicit transpose ----
    # NOTE: reference scales by C ** -0.5 (n_embd), not head_size ** -0.5.
    scale = float(C) ** -0.5
    wei = jnp.einsum("bqd,bkd->bqk", q, k,
                     preferred_element_type=jnp.float32) * scale    # (Bb,T,T) f32

    row = lax.broadcasted_iota(jnp.int32, (T, T), 0)
    col = lax.broadcasted_iota(jnp.int32, (T, T), 1)
    causal = (row >= col)[None, :, :]                               # (1,T,T)
    wei = jnp.where(causal, wei, -jnp.inf)

    # numerically-stable softmax; divide runs on the EUP (approx reciprocal)
    wei = wei - jnp.max(wei, axis=-1, keepdims=True)
    ew = jnp.exp(wei)
    p = ew * pl.reciprocal(jnp.sum(ew, axis=-1, keepdims=True), approx=True)
    # TODO(synk): train-mode dropout (p=0.15) on `p` would go here.

    out = jnp.einsum("bqk,bkd->bqd", p.astype(jnp.bfloat16), v,
                     preferred_element_type=jnp.float32)            # (Bb,T,hs)
    o_ref[...] = out.astype(o_ref.dtype)


@jax.jit
def head_attention(x, wq, wk, wv):
    """x: (B, T, C) f32; wq/wk/wv: (C, hs) pre-transposed Linear weights."""
    B, T, C = x.shape
    hs = wq.shape[1]
    assert C == N_EMBD and T <= BLOCK_SIZE

    # Fuse QKV weights once on the wrapper side; bf16 operands for the MXU.
    wqkv = jnp.concatenate([wq, wk, wv], axis=1).astype(jnp.bfloat16)  # (C, 3*hs)

    # Batch multiple sequences per grid step (largest divisor of B that is <= 8).
    # For B=2 this collapses the grid to a single invocation.
    bblk = max(d for d in range(1, min(B, 8) + 1) if B % d == 0)
    grid = (B // bblk,)

    cost = pl.CostEstimate(
        flops=2 * B * T * C * 3 * hs        # QKV projection
        + 2 * B * T * T * hs                # q @ k^T
        + 2 * B * T * T * hs,               # p @ v
        transcendentals=B * T * T,          # exp
        bytes_accessed=x.size * 4 + wqkv.size * 2 + B * T * hs * 4,
    )

    return pl.pallas_call(
        head_kernel,
        out_shape=jax.ShapeDtypeStruct((B, T, hs), x.dtype),
        grid_spec=pltpu.PrefetchScalarGridSpec(
            num_scalar_prefetch=0,
            grid=grid,
            in_specs=[
                pl.BlockSpec((bblk, T, C), lambda b: (b, 0, 0)),
                pl.BlockSpec((C, 3 * hs), lambda b: (0, 0)),
            ],
            out_specs=pl.BlockSpec((bblk, T, hs), lambda b: (b, 0, 0)),
        ),
        compiler_params=pltpu.CompilerParams(
            dimension_semantics=("parallel",),
        ),
        cost_estimate=cost,
    )(x, wqkv)


def reference_head(x, wq, wk, wv):
    """Pure-JAX f32 reference matching the PyTorch Head forward (eval mode)."""
    B, T, C = x.shape
    q = x @ wq
    k = x @ wk
    v = x @ wv
    wei = jnp.einsum("btd,bsd->bts", q, k) * (float(C) ** -0.5)
    mask = jnp.tril(jnp.ones((T, T), bool))
    wei = jnp.where(mask, wei, -jnp.inf)
    wei = jax.nn.softmax(wei, axis=-1)
    return jnp.einsum("bts,bsd->btd", wei, v)


if __name__ == "__main__":
    key = jax.random.PRNGKey(0)
    kx, kq, kk, kv = jax.random.split(key, 4)

    B, T = 2, BLOCK_SIZE                                 # (2, 64, 128)
    x = jax.random.normal(kx, (B, T, N_EMBD), jnp.float32)
    s = 0.02
    wq = s * jax.random.normal(kq, (N_EMBD, HEAD_SIZE), jnp.float32)
    wk = s * jax.random.normal(kk, (N_EMBD, HEAD_SIZE), jnp.float32)
    wv = s * jax.random.normal(kv, (N_EMBD, HEAD_SIZE), jnp.float32)

    out = head_attention(x, wq, wk, wv)
    out = jax.block_until_ready(out)

    ref = reference_head(x, wq, wk, wv)
    assert out.shape == (B, T, HEAD_SIZE)
    # bf16 MXU operands -> loosened tolerance vs the f32 reference.
    err = jnp.max(jnp.abs(out - ref))
    assert jnp.allclose(out, ref, atol=2e-2, rtol=2e-2), f"mismatch, max abs err {err}"

    print("KERNEL_OK")
</pallas_src>

<mosaic_0001>
module attributes {stable_mosaic.version = 11 : i64} {
  func.func @head_kernel(%arg0: i32, %arg1: memref<2x64x128xf32, #tpu.memory_space<vmem>>, %arg2: memref<128x96xbf16, #tpu.memory_space<vmem>>, %arg3: memref<2x64x32xf32, #tpu.memory_space<vmem>>) attributes {dimension_semantics = [#tpu.dimension_semantics<parallel>], iteration_bounds = array<i64: 1>, scalar_prefetch = 0 : i64, scratch_operands = 0 : i64, tpu.core_type = #tpu.core_type<tc>, window_params = [{transform_indices = @transform_0, window_bounds = array<i64: 2, 64, 128>}, {pipeline_mode = #tpu.pipeline_mode<synchronous>, transform_indices = @transform_1, window_bounds = array<i64: 128, 96>}, {transform_indices = @transform_2, window_bounds = array<i64: 2, 64, 32>}]} {
    %c0 = arith.constant 0 : index
    %c0_0 = arith.constant 0 : index
    %c0_1 = arith.constant 0 : index
    %0 = vector.load %arg1[%c0, %c0_0, %c0_1] : memref<2x64x128xf32, #tpu.memory_space<vmem>>, vector<2x64x128xf32>
    %1 = vector.shape_cast %0 : vector<2x64x128xf32> to vector<128x128xf32>
    %2 = arith.truncf %1 : vector<128x128xf32> to vector<128x128xbf16>
    %c0_2 = arith.constant 0 : index
    %c0_3 = arith.constant 0 : index
    %3 = vector.load %arg2[%c0_2, %c0_3] : memref<128x96xbf16, #tpu.memory_space<vmem>>, vector<128x96xbf16>
    %cst = arith.constant dense<0.000000e+00> : vector<128x96xf32>
    %4 = tpu.matmul %2, %3, %cst {dimension_numbers = #tpu.dot_dimension_numbers<[1], [0], [0], [1], [0, 0, 1, 1], [], []>} : vector<128x128xbf16>, vector<128x96xbf16>, vector<128x96xf32> -> vector<128x96xf32>
    %5 = vector.extract_strided_slice %4 {offsets = [0, 0], sizes = [128, 32], strides = [1, 1]} : vector<128x96xf32> to vector<128x32xf32>
    %6 = vector.shape_cast %5 : vector<128x32xf32> to vector<2x64x32xf32>
    %7 = arith.truncf %6 : vector<2x64x32xf32> to vector<2x64x32xbf16>
    %8 = vector.extract_strided_slice %4 {offsets = [0, 32], sizes = [128, 32], strides = [1, 1]} : vector<128x96xf32> to vector<128x32xf32>
    %9 = vector.shape_cast %8 : vector<128x32xf32> to vector<2x64x32xf32>
    %10 = arith.truncf %9 : vector<2x64x32xf32> to vector<2x64x32xbf16>
    %11 = vector.extract_strided_slice %4 {offsets = [0, 64], sizes = [128, 32], strides = [1, 1]} : vector<128x96xf32> to vector<128x32xf32>
    %12 = vector.shape_cast %11 : vector<128x32xf32> to vector<2x64x32xf32>
    %13 = arith.truncf %12 : vector<2x64x32xf32> to vector<2x64x32xbf16>
    "tpu.trace_start"() <{level = 10 : i32, message = "bqd,bkd->bqk"}> : () -> ()
    %cst_4 = arith.constant dense<0.000000e+00> : vector<2x64x64xf32>
    %14 = tpu.matmul %7, %10, %cst_4 {dimension_numbers = #tpu.dot_dimension_numbers<[2], [2], [1], [1], [0, 0, 0, 1, 1, 1], [0], [0]>} : vector<2x64x32xbf16>, vector<2x64x32xbf16>, vector<2x64x64xf32> -> vector<2x64x64xf32>
    "tpu.trace_stop"() : () -> ()
    %cst_5 = arith.constant 0.0883883461 : f32
    %15 = vector.broadcast %cst_5 : f32 to vector<2x64x64xf32>
    %16 = arith.mulf %14, %15 : vector<2x64x64xf32>
    %17 = tpu.iota {dimensions = array<i32: 0>} : vector<64x64xi32>
    %18 = tpu.iota {dimensions = array<i32: 1>} : vector<64x64xi32>
    %19 = arith.cmpi sge, %17, %18 : vector<64x64xi32>
    %20 = vector.shape_cast %19 : vector<64x64xi1> to vector<1x64x64xi1>
    %cst_6 = arith.constant 0xFF800000 : f32
    %21 = vector.shape_cast %20 : vector<1x64x64xi1> to vector<1x64x64xi1>
    %22 = vector.broadcast %21 : vector<1x64x64xi1> to vector<2x64x64xi1>
    %23 = vector.broadcast %cst_6 : f32 to vector<2x64x64xf32>
    %24 = arith.select %22, %16, %23 : vector<2x64x64xi1>, vector<2x64x64xf32>
    %cst_7 = arith.constant dense<0xFF800000> : vector<2x64xf32>
    %25 = vector.multi_reduction <maximumf>, %24, %cst_7 [2] : vector<2x64x64xf32> to vector<2x64xf32>
    %26 = vector.shape_cast %25 : vector<2x64xf32> to vector<2x64x1xf32>
    %27 = vector.broadcast %26 : vector<2x64x1xf32> to vector<2x64x64xf32>
    %28 = arith.subf %24, %27 : vector<2x64x64xf32>
    %29 = math.exp %28 : vector<2x64x64xf32>
    %cst_8 = arith.constant dense<0.000000e+00> : vector<2x64xf32>
    %30 = vector.multi_reduction <add>, %29, %cst_8 [2] : vector<2x64x64xf32> to vector<2x64xf32>
    %31 = vector.shape_cast %30 : vector<2x64xf32> to vector<2x64x1xf32>
    %32 = tpu.reciprocal %31 {approx = true} : vector<2x64x1xf32> -> vector<2x64x1xf32>
    %33 = vector.broadcast %32 : vector<2x64x1xf32> to vector<2x64x64xf32>
    %34 = arith.mulf %29, %33 : vector<2x64x64xf32>
    %35 = arith.truncf %34 : vector<2x64x64xf32> to vector<2x64x64xbf16>
    "tpu.trace_start"() <{level = 10 : i32, message = "bqk,bkd->bqd"}> : () -> ()
    %cst_9 = arith.constant dense<0.000000e+00> : vector<2x64x32xf32>
    %36 = tpu.matmul %35, %13, %cst_9 {dimension_numbers = #tpu.dot_dimension_numbers<[2], [1], [1], [2], [0, 0, 0, 1, 1, 2], [0], [0]>} : vector<2x64x64xbf16>, vector<2x64x32xbf16>, vector<2x64x32xf32> -> vector<2x64x32xf32>
    "tpu.trace_stop"() : () -> ()
    %c0_10 = arith.constant 0 : index
    %c0_11 = arith.constant 0 : index
    %c0_12 = arith.constant 0 : index
    %37 = vector.load %arg3[%c0_10, %c0_11, %c0_12] : memref<2x64x32xf32, #tpu.memory_space<vmem>>, vector<2x64x32xf32>
    tpu.vector_store %arg3[%c0_10, %c0_11, %c0_12], %36 {strides = array<i32>} : memref<2x64x32xf32, #tpu.memory_space<vmem>>, vector<2x64x32xf32>,
    return
  }
  func.func @transform_0(%arg0: i32) -> (i32, i32, i32) {
    %c0_i32 = arith.constant 0 : i32
    %c0_i32_0 = arith.constant 0 : i32
    %c0_i32_1 = arith.constant 0 : i32
    return %arg0, %c0_i32, %c0_i32_0 : i32, i32, i32
  }
  func.func @transform_1(%arg0: i32) -> (i32, i32) {
    %c0_i32 = arith.constant 0 : i32
    %c0_i32_0 = arith.constant 0 : i32
    %c0_i32_1 = arith.constant 0 : i32
    return %c0_i32, %c0_i32_0 : i32, i32
  }
  func.func @transform_2(%arg0: i32) -> (i32, i32, i32) {
    %c0_i32 = arith.constant 0 : i32
    %c0_i32_0 = arith.constant 0 : i32
    %c0_i32_1 = arith.constant 0 : i32
    return %arg0, %c0_i32, %c0_i32_0 : i32, i32, i32
  }
}

</mosaic_0001>

<llo_original>
// kernel: head_attention.1
$region0: #{head_attention.1}
  #allocation0 [shape = 'u32[]', space=smem, size = 0x4, offset = 0x4, fixed_abs, tag = 'smem constant byte address 0x4 - core index']
  #allocation1 [shape = 'u32[144,128]{1,0:T(1,128)}', space=vmem, size = 0x12000, scoped, tag = 'internal scratch']
  %s0 = inlined_call_operand.vmem [shape: f32[2,64,128], index: 0, kind: input, shape index: {}]
  %s1 = inlined_call_operand.vmem [shape: bf16[128,96], index: 1, kind: input, shape index: {}]
  %s2 = inlined_call_operand.vmem [shape: f32[2,64,32], index: 2, kind: output, shape index: {}]
  %s3 = sld [smem:[#allocation0]]
  $region18: #{head_attention.1} parent=0
    _
  %s5 = ssub.s32 1, %s3
  %s6 = scalar_select 0, %s5, %s3
  // Predicated region
  $region2: #{head_attention.1} parent=0 // pred_check
    _
  $region3: #{head_attention.1} parent=0 // pred_check_branch
    %8 = sbr.rel (0) target = $region5
  $region4: #{head_attention.1} parent=0 // pred_region
    _
  $region5: #{head_attention.1} parent=0 // pred_fallthru
    _
  // Predicated region
  $region6: #{head_attention.1} parent=0 // pred_check
    _
  $region7: #{head_attention.1} parent=0 // pred_check_branch
    %10 = sbr.rel (0) target = $region9
  $region8: #{head_attention.1} parent=0 // pred_region
    _
  $region9: #{head_attention.1} parent=0 // pred_fallthru
    _
  %v12 = vld [vmem:[%s0] sm:$0xff]
  %v13 = vld [vmem:[%s0 + $0x8] sm:$0xff]
  %v14 = vld [vmem:[%s0 + $0x10] sm:$0xff]
  %v15 = vld [vmem:[%s0 + $0x18] sm:$0xff]
  %v16 = vld [vmem:[%s0 + $0x20] sm:$0xff]
  %v17 = vld [vmem:[%s0 + $0x28] sm:$0xff]
  %v18 = vld [vmem:[%s0 + $0x30] sm:$0xff]
  %v19 = vld [vmem:[%s0 + $0x38] sm:$0xff]
  %v20 = vld [vmem:[%s0 + $0x40] sm:$0xff]
  %v21 = vld [vmem:[%s0 + $0x48] sm:$0xff]
  %v22 = vld [vmem:[%s0 + $0x50] sm:$0xff]
  %v23 = vld [vmem:[%s0 + $0x58] sm:$0xff]
  %v24 = vld [vmem:[%s0 + $0x60] sm:$0xff]
  %v25 = vld [vmem:[%s0 + $0x68] sm:$0xff]
  %v26 = vld [vmem:[%s0 + $0x70] sm:$0xff]
  %v27 = vld [vmem:[%s0 + $0x78] sm:$0xff]
  %v28 = vpack.c.bf16 %v13, %v12
  %v29 = vpack.c.bf16 %v15, %v14
  %v30 = vpack.c.bf16 %v17, %v16
  %v31 = vpack.c.bf16 %v19, %v18
  %v32 = vpack.c.bf16 %v21, %v20
  %v33 = vpack.c.bf16 %v23, %v22
  %v34 = vpack.c.bf16 %v25, %v24
  %v35 = vpack.c.bf16 %v27, %v26
  %v36 = vld [vmem:[%s1] sm:$0xf]
  %v37 = vld [vmem:[%s1 + $0x4] sm:$0xf]
  %v38 = vld [vmem:[%s1 + $0x8] sm:$0xf]
  %v39 = vld [vmem:[%s1 + $0xc] sm:$0xf]
  %v40 = vld [vmem:[%s1 + $0x10] sm:$0xf]
  %v41 = vld [vmem:[%s1 + $0x14] sm:$0xf]
  %v42 = vld [vmem:[%s1 + $0x18] sm:$0xf]
  %v43 = vld [vmem:[%s1 + $0x1c] sm:$0xf]
  %v44 = vld [vmem:[%s1 + $0x20] sm:$0xf]
  %v45 = vld [vmem:[%s1 + $0x24] sm:$0xf]
  %v46 = vld [vmem:[%s1 + $0x28] sm:$0xf]
  %v47 = vld [vmem:[%s1 + $0x2c] sm:$0xf]
  %v48 = vld [vmem:[%s1 + $0x30] sm:$0xf]
  %v49 = vld [vmem:[%s1 + $0x34] sm:$0xf]
  %v50 = vld [vmem:[%s1 + $0x38] sm:$0xf]
  %v51 = vld [vmem:[%s1 + $0x3c] sm:$0xf]
  %v68 = vunpack.c.l.b16 %v36
  %v69 = vunpack.c.l.b16 %v37
  %v70 = vunpack.c.l.b16 %v38
  %v71 = vunpack.c.l.b16 %v39
  %v72 = vunpack.c.l.b16 %v40
  %v73 = vunpack.c.l.b16 %v41
  %v74 = vunpack.c.l.b16 %v42
  %v75 = vunpack.c.l.b16 %v43
  %v76 = vunpack.c.l.b16 %v44
  %v77 = vunpack.c.l.b16 %v45
  %v78 = vunpack.c.l.b16 %v46
  %v79 = vunpack.c.l.b16 %v47
  %v80 = vunpack.c.l.b16 %v48
  %v81 = vunpack.c.l.b16 %v49
  %v82 = vunpack.c.l.b16 %v50
  %v83 = vunpack.c.l.b16 %v51
  %v84 = vpack.c.b16 %v69, %v68
  %v85 = vpack.c.b16 %v71, %v70
  %v86 = vpack.c.b16 %v73, %v72
  %v87 = vpack.c.b16 %v75, %v74
  %v88 = vpack.c.b16 %v77, %v76
  %v89 = vpack.c.b16 %v79, %v78
  %v90 = vpack.c.b16 %v81, %v80
  %v91 = vpack.c.b16 %v83, %v82
  %100 = vmatprep.subr.bf16.mxu0 0
  %101 = vmatpush1.bf16.msra.mxu0 %v84
  %102 = vmatprep.subr.bf16.mxu0 0
  %103 = vmatpush1.bf16.msra.mxu0 %v85
  %104 = vmatprep.subr.bf16.mxu0 0
  %105 = vmatpush1.bf16.msra.mxu0 %v86
  %106 = vmatprep.subr.bf16.mxu0 0
  %107 = vmatpush1.bf16.msra.mxu0 %v87
  %108 = vmatprep.subr.bf16.mxu0 0
  %109 = vmatpush1.bf16.msra.mxu0 %v88
  %110 = vmatprep.subr.bf16.mxu0 0
  %111 = vmatpush1.bf16.msra.mxu0 %v89
  %112 = vmatprep.subr.bf16.mxu0 0
  %113 = vmatpush1.bf16.msra.mxu0 %v90
  %114 = vmatprep.subr.bf16.mxu0 0
  %115 = vmatpush1.bf16.msra.mxu0 %v91
  %116 = vmatprep.subr.bf16.mxu0 0
  %117 = vmatpush1.bf16.msra.mxu0 0
  %118 = vmatprep.subr.bf16.mxu0 0
  %119 = vmatpush1.bf16.msra.mxu0 0
  %120 = vmatprep.subr.bf16.mxu0 0
  %121 = vmatpush1.bf16.msra.mxu0 0
  %122 = vmatprep.subr.bf16.mxu0 0
  %123 = vmatpush1.bf16.msra.mxu0 0
  %124 = vmatprep.subr.bf16.mxu0 0
  %125 = vmatpush1.bf16.msra.mxu0 0
  %126 = vmatprep.subr.bf16.mxu0 0
  %127 = vmatpush1.bf16.msra.mxu0 0
  %128 = vmatprep.subr.bf16.mxu0 0
  %129 = vmatpush1.bf16.msra.mxu0 0
  %130 = vmatprep.subr.bf16.mxu0 0
  %131 = vmatpush1.bf16.msra.mxu0 0
  %132 = vmatprep.mubr.bf16.mxu0 0
  %133 = vmatmul.mubr.bf16.gmra.mrb[0].mxu0 %v28
  %v134 = vpop.f32.mrb[0].mxu0
  %v135 = vadd.f32 0.0, %v134
  %v136 = vpop.f32.mrb[0].mxu0
  %v137 = vpop.f32.mrb[0].mxu0
  %v138 = vadd.f32 0.0, %v137
  %v139 = vpop.f32.mrb[0].mxu0
  %140 = vmatprep.mubr.bf16.mxu0 0
  %141 = vmatmul.mubr.bf16.gmra.mrb[0].mxu0 %v29
  %v142 = vpop.f32.mrb[0].mxu0
  %v143 = vadd.f32 0.0, %v142
  %v144 = vpop.f32.mrb[0].mxu0
  %v145 = vpop.f32.mrb[0].mxu0
  %v146 = vadd.f32 0.0, %v145
  %v147 = vpop.f32.mrb[0].mxu0
  %148 = vmatprep.mubr.bf16.mxu0 0
  %149 = vmatmul.mubr.bf16.gmra.mrb[0].mxu0 %v30
  %v150 = vpop.f32.mrb[0].mxu0
  %v151 = vadd.f32 0.0, %v150
  %v152 = vpop.f32.mrb[0].mxu0
  %v153 = vpop.f32.mrb[0].mxu0
  %v154 = vadd.f32 0.0, %v153
  %v155 = vpop.f32.mrb[0].mxu0
  %156 = vmatprep.mubr.bf16.mxu0 0
  %157 = vmatmul.mubr.bf16.gmra.mrb[0].mxu0 %v31
  %v158 = vpop.f32.mrb[0].mxu0
  %v159 = vadd.f32 0.0, %v158
  %v160 = vpop.f32.mrb[0].mxu0
  %v161 = vpop.f32.mrb[0].mxu0
  %v162 = vadd.f32 0.0, %v161
  %v163 = vpop.f32.mrb[0].mxu0
  %164 = vmatprep.mubr.bf16.mxu0 0
  %165 = vmatmul.mubr.bf16.gmra.mrb[0].mxu0 %v32
  %v166 = vpop.f32.mrb[0].mxu0
  %v167 = vadd.f32 0.0, %v166
  %v168 = vpop.f32.mrb[0].mxu0
  %v169 = vpop.f32.mrb[0].mxu0
  %v170 = vadd.f32 0.0, %v169
  %v171 = vpop.f32.mrb[0].mxu0
  %172 = vmatprep.mubr.bf16.mxu0 0
  %173 = vmatmul.mubr.bf16.gmra.mrb[0].mxu0 %v33
  %v174 = vpop.f32.mrb[0].mxu0
  %v175 = vadd.f32 0.0, %v174
  %v176 = vpop.f32.mrb[0].mxu0
  %v177 = vpop.f32.mrb[0].mxu0
  %v178 = vadd.f32 0.0, %v177
  %v179 = vpop.f32.mrb[0].mxu0
  %180 = vmatprep.mubr.bf16.mxu0 0
  %181 = vmatmul.mubr.bf16.gmra.mrb[0].mxu0 %v34
  %v182 = vpop.f32.mrb[0].mxu0
  %v183 = vadd.f32 0.0, %v182
  %v184 = vpop.f32.mrb[0].mxu0
  %v185 = vpop.f32.mrb[0].mxu0
  %v186 = vadd.f32 0.0, %v185
  %v187 = vpop.f32.mrb[0].mxu0
  %188 = vmatprep.mubr.bf16.mxu0 0
  %189 = vmatmul.mubr.bf16.gmra.mrb[0].mxu0 %v35
  %v190 = vpop.f32.mrb[0].mxu0
  %v191 = vadd.f32 0.0, %v190
  %v192 = vpop.f32.mrb[0].mxu0
  %v193 = vpop.f32.mrb[0].mxu0
  %v194 = vadd.f32 0.0, %v193
  %v195 = vpop.f32.mrb[0].mxu0
  %196 = vdwg.mxu0
  %v197 = vpack.c.bf16 %v138, %v135
  %v198 = vpack.c.bf16 %v146, %v143
  %v199 = vpack.c.bf16 %v154, %v151
  %v200 = vpack.c.bf16 %v162, %v159
  %v201 = vpack.c.bf16 %v170, %v167
  %v202 = vpack.c.bf16 %v178, %v175
  %v203 = vpack.c.bf16 %v186, %v183
  %v204 = vpack.c.bf16 %v194, %v191
  %209 = vrot.lane.b32.xlu0 %v197, 96
  %v210 = vpop.permute.xlu0 %209
  %211 = vrot.lane.b32.xlu0 %v198, 96
  %v212 = vpop.permute.xlu0 %211
  %213 = vrot.lane.b32.xlu0 %v199, 96
  %v214 = vpop.permute.xlu0 %213
  %215 = vrot.lane.b32.xlu0 %v200, 96
  %v216 = vpop.permute.xlu0 %215
  %vm217 = vcmask 261120
  %v219 = vsel %vm217, %v197, 0
  %v222 = vsel %vm217, %v198, 0
  %v225 = vsel %vm217, %v199, 0
  %v228 = vsel %vm217, %v200, 0
  %v231 = vsel %vm217, %v210, 0
  %v234 = vsel %vm217, %v212, 0
  %v237 = vsel %vm217, %v214, 0
  %v240 = vsel %vm217, %v216, 0
  %242 = vmatprep.subr.bf16.mxu0 0
  %243 = vmatpush1.bf16.xpose.msra.mxu0 %v231
  %244 = vmatprep.subr.bf16.mxu0 0
  %245 = vmatpush1.bf16.xpose.msra.mxu0 %v234
  %246 = vmatprep.subr.bf16.mxu0 0
  %247 = vmatpush1.bf16.xpose.msra.mxu0 %v237
  %248 = vmatprep.subr.bf16.mxu0 0
  %249 = vmatpush1.bf16.xpose.msra.mxu0 %v240
  %250 = vmatprep.subr.bf16.mxu0 0
  %251 = vmatpush1.bf16.xpose.msra.mxu0 0
  %252 = vmatprep.subr.bf16.mxu0 0
  %253 = vmatpush1.bf16.xpose.msra.mxu0 0
  %254 = vmatprep.subr.bf16.mxu0 0
  %255 = vmatpush1.bf16.xpose.msra.mxu0 0
  %256 = vmatprep.subr.bf16.mxu0 0
  %257 = vmatpush1.bf16.xpose.msra.mxu0 0
  %258 = vmatprep.subr.bf16.mxu0 0
  %259 = vmatpush1.bf16.xpose.msra.mxu0 0
  %260 = vmatprep.subr.bf16.mxu0 0
  %261 = vmatpush1.bf16.xpose.msra.mxu0 0
  %262 = vmatprep.subr.bf16.mxu0 0
  %263 = vmatpush1.bf16.xpose.msra.mxu0 0
  %264 = vmatprep.subr.bf16.mxu0 0
  %265 = vmatpush1.bf16.xpose.msra.mxu0 0
  %266 = vmatprep.subr.bf16.mxu0 0
  %267 = vmatpush1.bf16.xpose.msra.mxu0 0
  %268 = vmatprep.subr.bf16.mxu0 0
  %269 = vmatpush1.bf16.xpose.msra.mxu0 0
  %270 = vmatprep.subr.bf16.mxu0 0
  %271 = vmatpush1.bf16.xpose.msra.mxu0 0
  %272 = vmatprep.subr.bf16.mxu0 0
  %273 = vmatpush1.bf16.xpose.msra.mxu0 0
  %274 = vmatprep.mubr.bf16.mxu0 0
  %275 = vmatmul.mubr.bf16.gmra.mrb[0].mxu0 %v219
  %v276 = vpop.f32.mrb[0].mxu0
  %v277 = vadd.f32 0.0, %v276
  %v278 = vpop.f32.mrb[0].mxu0
  %v279 = vpop.f32.mrb[0].mxu0
  %v280 = vadd.f32 0.0, %v279
  %v281 = vpop.f32.mrb[0].mxu0
  %282 = vmatprep.mubr.bf16.mxu0 0
  %283 = vmatmul.mubr.bf16.gmra.mrb[0].mxu0 %v222
  %v284 = vpop.f32.mrb[0].mxu0
  %v285 = vadd.f32 0.0, %v284
  %v286 = vpop.f32.mrb[0].mxu0
  %v287 = vpop.f32.mrb[0].mxu0
  %v288 = vadd.f32 0.0, %v287
  %v289 = vpop.f32.mrb[0].mxu0
  %290 = vmatprep.mubr.bf16.mxu0 0
  %291 = vmatmul.mubr.bf16.gmra.mrb[0].mxu0 %v225
  %v292 = vpop.f32.mrb[0].mxu0
  %v293 = vadd.f32 0.0, %v292
  %v294 = vpop.f32.mrb[0].mxu0
  %v295 = vpop.f32.mrb[0].mxu0
  %v296 = vadd.f32 0.0, %v295
  %v297 = vpop.f32.mrb[0].mxu0
  %298 = vmatprep.mubr.bf16.mxu0 0
  %299 = vmatmul.mubr.bf16.gmra.mrb[0].mxu0 %v228
  %v300 = vpop.f32.mrb[0].mxu0
  %v301 = vadd.f32 0.0, %v300
  %v302 = vpop.f32.mrb[0].mxu0
  %v303 = vpop.f32.mrb[0].mxu0
  %v304 = vadd.f32 0.0, %v303
  %v305 = vpop.f32.mrb[0].mxu0
  %306 = vdwg.mxu0
  %311 = vrot.lane.b32.xlu0 %v201, 96
  %v312 = vpop.permute.xlu0 %311
  %313 = vrot.lane.b32.xlu0 %v202, 96
  %v314 = vpop.permute.xlu0 %313
  %315 = vrot.lane.b32.xlu0 %v203, 96
  %v316 = vpop.permute.xlu0 %315
  %317 = vrot.lane.b32.xlu0 %v204, 96
  %v318 = vpop.permute.xlu0 %317
  %v320 = vsel %vm217, %v201, 0
  %v323 = vsel %vm217, %v202, 0
  %v326 = vsel %vm217, %v203, 0
  %v329 = vsel %vm217, %v204, 0
  %v332 = vsel %vm217, %v312, 0
  %v335 = vsel %vm217, %v314, 0
  %v338 = vsel %vm217, %v316, 0
  %v341 = vsel %vm217, %v318, 0
  %343 = vmatprep.subr.bf16.mxu0 0
  %344 = vmatpush1.bf16.xpose.msra.mxu0 %v332
  %345 = vmatprep.subr.bf16.mxu0 0
  %346 = vmatpush1.bf16.xpose.msra.mxu0 %v335
  %347 = vmatprep.subr.bf16.mxu0 0
  %348 = vmatpush1.bf16.xpose.msra.mxu0 %v338
  %349 = vmatprep.subr.bf16.mxu0 0
  %350 = vmatpush1.bf16.xpose.msra.mxu0 %v341
  %351 = vmatprep.subr.bf16.mxu0 0
  %352 = vmatpush1.bf16.xpose.msra.mxu0 0
  %353 = vmatprep.subr.bf16.mxu0 0
  %354 = vmatpush1.bf16.xpose.msra.mxu0 0
  %355 = vmatprep.subr.bf16.mxu0 0
  %356 = vmatpush1.bf16.xpose.msra.mxu0 0
  %357 = vmatprep.subr.bf16.mxu0 0
  %358 = vmatpush1.bf16.xpose.msra.mxu0 0
  %359 = vmatprep.subr.bf16.mxu0 0
  %360 = vmatpush1.bf16.xpose.msra.mxu0 0
  %361 = vmatprep.subr.bf16.mxu0 0
  %362 = vmatpush1.bf16.xpose.msra.mxu0 0
  %363 = vmatprep.subr.bf16.mxu0 0
  %364 = vmatpush1.bf16.xpose.msra.mxu0 0
  %365 = vmatprep.subr.bf16.mxu0 0
  %366 = vmatpush1.bf16.xpose.msra.mxu0 0
  %367 = vmatprep.subr.bf16.mxu0 0
  %368 = vmatpush1.bf16.xpose.msra.mxu0 0
  %369 = vmatprep.subr.bf16.mxu0 0
  %370 = vmatpush1.bf16.xpose.msra.mxu0 0
  %371 = vmatprep.subr.bf16.mxu0 0
  %372 = vmatpush1.bf16.xpose.msra.mxu0 0
  %373 = vmatprep.subr.bf16.mxu0 0
  %374 = vmatpush1.bf16.xpose.msra.mxu0 0
  %375 = vmatprep.mubr.bf16.mxu0 0
  %376 = vmatmul.mubr.bf16.gmra.mrb[0].mxu0 %v320
  %v377 = vpop.f32.mrb[0].mxu0
  %v378 = vadd.f32 0.0, %v377
  %v379 = vpop.f32.mrb[0].mxu0
  %v380 = vpop.f32.mrb[0].mxu0
  %v381 = vadd.f32 0.0, %v380
  %v382 = vpop.f32.mrb[0].mxu0
  %383 = vmatprep.mubr.bf16.mxu0 0
  %384 = vmatmul.mubr.bf16.gmra.mrb[0].mxu0 %v323
  %v385 = vpop.f32.mrb[0].mxu0
  %v386 = vadd.f32 0.0, %v385
  %v387 = vpop.f32.mrb[0].mxu0
  %v388 = vpop.f32.mrb[0].mxu0
  %v389 = vadd.f32 0.0, %v388
  %v390 = vpop.f32.mrb[0].mxu0
  %391 = vmatprep.mubr.bf16.mxu0 0
  %392 = vmatmul.mubr.bf16.gmra.mrb[0].mxu0 %v326
  %v393 = vpop.f32.mrb[0].mxu0
  %v394 = vadd.f32 0.0, %v393
  %v395 = vpop.f32.mrb[0].mxu0
  %v396 = vpop.f32.mrb[0].mxu0
  %v397 = vadd.f32 0.0, %v396
  %v398 = vpop.f32.mrb[0].mxu0
  %399 = vmatprep.mubr.bf16.mxu0 0
  %400 = vmatmul.mubr.bf16.gmra.mrb[0].mxu0 %v329
  %v401 = vpop.f32.mrb[0].mxu0
  %v402 = vadd.f32 0.0, %v401
  %v403 = vpop.f32.mrb[0].mxu0
  %v404 = vpop.f32.mrb[0].mxu0
  %v405 = vadd.f32 0.0, %v404
  %v406 = vpop.f32.mrb[0].mxu0
  %407 = vdwg.mxu0
  %v408 = vmul.f32 %v277, 0.088388346
  %v409 = vmul.f32 %v280, 0.088388346
  %v410 = vmul.f32 %v285, 0.088388346
  %v411 = vmul.f32 %v288, 0.088388346
  %v412 = vmul.f32 %v293, 0.088388346
  %v413 = vmul.f32 %v296, 0.088388346
  %v414 = vmul.f32 %v301, 0.088388346
  %v415 = vmul.f32 %v304, 0.088388346
  %v416 = vmul.f32 %v378, 0.088388346
  %v417 = vmul.f32 %v381, 0.088388346
  %v418 = vmul.f32 %v386, 0.088388346
  %v419 = vmul.f32 %v389, 0.088388346
  %v420 = vmul.f32 %v394, 0.088388346
  %v421 = vmul.f32 %v397, 0.088388346
  %v422 = vmul.f32 %v402, 0.088388346
  %v423 = vmul.f32 %v405, 0.088388346
  %v424 = vlaneseq
  %v425 = vshrl.u32 %v424, 7
  %v426 = vadd.s32 %v425, 8
  %v427 = vadd.s32 %v425, 16
  %v428 = vadd.s32 %v425, 24
  %v429 = vadd.s32 %v425, 32
  %v430 = vadd.s32 %v425, 40
  %v431 = vadd.s32 %v425, 48
  %v432 = vadd.s32 %v425, 56
  %v433 = vlaneseq
  %v434 = vand.u32 %v433, 127
  %vm435 = vcmp.ge.s32.totalorder %v425, %v434
  %vm436 = vcmp.ge.s32.totalorder %v426, %v434
  %vm437 = vcmp.ge.s32.totalorder %v427, %v434
  %vm438 = vcmp.ge.s32.totalorder %v428, %v434
  %vm439 = vcmp.ge.s32.totalorder %v429, %v434
  %vm440 = vcmp.ge.s32.totalorder %v430, %v434
  %vm441 = vcmp.ge.s32.totalorder %v431, %v434
  %vm442 = vcmp.ge.s32.totalorder %v432, %v434
  %v443 = vsel %vm435, 1, 0
  %v444 = vsel %vm436, 1, 0
  %v445 = vsel %vm437, 1, 0
  %v446 = vsel %vm438, 1, 0
  %v447 = vsel %vm439, 1, 0
  %v448 = vsel %vm440, 1, 0
  %v449 = vsel %vm441, 1, 0
  %v450 = vsel %vm442, 1, 0
  %vm451 = vcmp.eq.s32.totalorder %v443, 1
  %vm452 = vcmp.eq.s32.totalorder %v444, 1
  %vm453 = vcmp.eq.s32.totalorder %v445, 1
  %vm454 = vcmp.eq.s32.totalorder %v446, 1
  %vm455 = vcmp.eq.s32.totalorder %v447, 1
  %vm456 = vcmp.eq.s32.totalorder %v448, 1
  %vm457 = vcmp.eq.s32.totalorder %v449, 1
  %vm458 = vcmp.eq.s32.totalorder %v450, 1
  %v459 = vsel %vm451, %v408, -inf
  %v460 = vsel %vm452, %v409, -inf
  %v461 = vsel %vm453, %v410, -inf
  %v462 = vsel %vm454, %v411, -inf
  %v463 = vsel %vm455, %v412, -inf
  %v464 = vsel %vm456, %v413, -inf
  %v465 = vsel %vm457, %v414, -inf
  %v466 = vsel %vm458, %v415, -inf
  %v467 = vsel %vm451, %v416, -inf
  %v468 = vsel %vm452, %v417, -inf
  %v469 = vsel %vm453, %v418, -inf
  %v470 = vsel %vm454, %v419, -inf
  %v471 = vsel %vm455, %v420, -inf
  %v472 = vsel %vm456, %v421, -inf
  %v473 = vsel %vm457, %v422, -inf
  %v474 = vsel %vm458, %v423, -inf
  %vm475 = vcmask 523264
  %v476 = vsel %vm475, %v459, -inf
  %477 = vmax.xlane.f32.xlu0 %v476
  %v478 = vpop.xlane.xlu0 %477
  %v479 = vsel %vm475, %v460, -inf
  %480 = vmax.xlane.f32.xlu0 %v479
  %v481 = vpop.xlane.xlu0 %480
  %v482 = vsel %vm475, %v461, -inf
  %483 = vmax.xlane.f32.xlu0 %v482
  %v484 = vpop.xlane.xlu0 %483
  %v485 = vsel %vm475, %v462, -inf
  %486 = vmax.xlane.f32.xlu0 %v485
  %v487 = vpop.xlane.xlu0 %486
  %v488 = vsel %vm475, %v463, -inf
  %489 = vmax.xlane.f32.xlu0 %v488
  %v490 = vpop.xlane.xlu0 %489
  %v491 = vsel %vm475, %v464, -inf
  %492 = vmax.xlane.f32.xlu0 %v491
  %v493 = vpop.xlane.xlu0 %492
  %v494 = vsel %vm475, %v465, -inf
  %495 = vmax.xlane.f32.xlu0 %v494
  %v496 = vpop.xlane.xlu0 %495
  %v497 = vsel %vm475, %v466, -inf
  %498 = vmax.xlane.f32.xlu0 %v497
  %v499 = vpop.xlane.xlu0 %498
  %v500 = vsel %vm475, %v467, -inf
  %501 = vmax.xlane.f32.xlu0 %v500
  %v502 = vpop.xlane.xlu0 %501
  %v503 = vsel %vm475, %v468, -inf
  %504 = vmax.xlane.f32.xlu0 %v503
  %v505 = vpop.xlane.xlu0 %504
  %v506 = vsel %vm475, %v469, -inf
  %507 = vmax.xlane.f32.xlu0 %v506
  %v508 = vpop.xlane.xlu0 %507
  %v509 = vsel %vm475, %v470, -inf
  %510 = vmax.xlane.f32.xlu0 %v509
  %v511 = vpop.xlane.xlu0 %510
  %v512 = vsel %vm475, %v471, -inf
  %513 = vmax.xlane.f32.xlu0 %v512
  %v514 = vpop.xlane.xlu0 %513
  %v515 = vsel %vm475, %v472, -inf
  %516 = vmax.xlane.f32.xlu0 %v515
  %v517 = vpop.xlane.xlu0 %516
  %v518 = vsel %vm475, %v473, -inf
  %519 = vmax.xlane.f32.xlu0 %v518
  %v520 = vpop.xlane.xlu0 %519
  %v521 = vsel %vm475, %v474, -inf
  %522 = vmax.xlane.f32.xlu0 %v521
  %v523 = vpop.xlane.xlu0 %522
  %v524 = vsub.f32 %v459, %v478
  %v525 = vsub.f32 %v460, %v481
  %v526 = vsub.f32 %v461, %v484
  %v527 = vsub.f32 %v462, %v487
  %v528 = vsub.f32 %v463, %v490
  %v529 = vsub.f32 %v464, %v493
  %v530 = vsub.f32 %v465, %v496
  %v531 = vsub.f32 %v466, %v499
  %v532 = vsub.f32 %v467, %v502
  %v533 = vsub.f32 %v468, %v505
  %v534 = vsub.f32 %v469, %v508
  %v535 = vsub.f32 %v470, %v511
  %v536 = vsub.f32 %v471, %v514
  %v537 = vsub.f32 %v472, %v517
  %v538 = vsub.f32 %v473, %v520
  %v539 = vsub.f32 %v474, %v523
  %v540 = vmul.f32 %v524, 1.442695
  %v541 = vpow.pop %v540
  %v542 = vmul.f32 %v525, 1.442695
  %v543 = vpow.pop %v542
  %v544 = vmul.f32 %v526, 1.442695
  %v545 = vpow.pop %v544
  %v546 = vmul.f32 %v527, 1.442695
  %v547 = vpow.pop %v546
  %v548 = vmul.f32 %v528, 1.442695
  %v549 = vpow.pop %v548
  %v550 = vmul.f32 %v529, 1.442695
  %v551 = vpow.pop %v550
  %v552 = vmul.f32 %v530, 1.442695
  %v553 = vpow.pop %v552
  %v554 = vmul.f32 %v531, 1.442695
  %v555 = vpow.pop %v554
  %v556 = vmul.f32 %v532, 1.442695
  %v557 = vpow.pop %v556
  %v558 = vmul.f32 %v533, 1.442695
  %v559 = vpow.pop %v558
  %v560 = vmul.f32 %v534, 1.442695
  %v561 = vpow.pop %v560
  %v562 = vmul.f32 %v535, 1.442695
  %v563 = vpow.pop %v562
  %v564 = vmul.f32 %v536, 1.442695
  %v565 = vpow.pop %v564
  %v566 = vmul.f32 %v537, 1.442695
  %v567 = vpow.pop %v566
  %v568 = vmul.f32 %v538, 1.442695
  %v569 = vpow.pop %v568
  %v570 = vmul.f32 %v539, 1.442695
  %v571 = vpow.pop %v570
  %v572 = vsel %vm475, %v541, 0.0
  %573 = vadd.xlane.f32.xlu0 %v572
  %v574 = vpop.xlane.xlu0 %573
  %v575 = vsel %vm475, %v543, 0.0
  %576 = vadd.xlane.f32.xlu0 %v575
  %v577 = vpop.xlane.xlu0 %576
  %v578 = vsel %vm475, %v545, 0.0
  %579 = vadd.xlane.f32.xlu0 %v578
  %v580 = vpop.xlane.xlu0 %579
  %v581 = vsel %vm475, %v547, 0.0
  %582 = vadd.xlane.f32.xlu0 %v581
  %v583 = vpop.xlane.xlu0 %582
  %v584 = vsel %vm475, %v549, 0.0
  %585 = vadd.xlane.f32.xlu0 %v584
  %v586 = vpop.xlane.xlu0 %585
  %v587 = vsel %vm475, %v551, 0.0
  %588 = vadd.xlane.f32.xlu0 %v587
  %v589 = vpop.xlane.xlu0 %588
  %v590 = vsel %vm475, %v553, 0.0
  %591 = vadd.xlane.f32.xlu0 %v590
  %v592 = vpop.xlane.xlu0 %591
  %v593 = vsel %vm475, %v555, 0.0
  %594 = vadd.xlane.f32.xlu0 %v593
  %v595 = vpop.xlane.xlu0 %594
  %v596 = vsel %vm475, %v557, 0.0
  %597 = vadd.xlane.f32.xlu0 %v596
  %v598 = vpop.xlane.xlu0 %597
  %v599 = vsel %vm475, %v559, 0.0
  %600 = vadd.xlane.f32.xlu0 %v599
  %v601 = vpop.xlane.xlu0 %600
  %v602 = vsel %vm475, %v561, 0.0
  %603 = vadd.xlane.f32.xlu0 %v602
  %v604 = vpop.xlane.xlu0 %603
  %v605 = vsel %vm475, %v563, 0.0
  %606 = vadd.xlane.f32.xlu0 %v605
  %v607 = vpop.xlane.xlu0 %606
  %v608 = vsel %vm475, %v565, 0.0
  %609 = vadd.xlane.f32.xlu0 %v608
  %v610 = vpop.xlane.xlu0 %609
  %v611 = vsel %vm475, %v567, 0.0
  %612 = vadd.xlane.f32.xlu0 %v611
  %v613 = vpop.xlane.xlu0 %612
  %v614 = vsel %vm475, %v569, 0.0
  %615 = vadd.xlane.f32.xlu0 %v614
  %v616 = vpop.xlane.xlu0 %615
  %v617 = vsel %vm475, %v571, 0.0
  %618 = vadd.xlane.f32.xlu0 %v617
  %v619 = vpop.xlane.xlu0 %618
  %v620 = vrcp.pop %v574
  %v621 = vrcp.pop %v577
  %v622 = vrcp.pop %v580
  %v623 = vrcp.pop %v583
  %v624 = vrcp.pop %v586
  %v625 = vrcp.pop %v589
  %v626 = vrcp.pop %v592
  %v627 = vrcp.pop %v595
  %v628 = vrcp.pop %v598
  %v629 = vrcp.pop %v601
  %v630 = vrcp.pop %v604
  %v631 = vrcp.pop %v607
  %v632 = vrcp.pop %v610
  %v633 = vrcp.pop %v613
  %v634 = vrcp.pop %v616
  %v635 = vrcp.pop %v619
  %v636 = vmul.f32 %v541, %v620
  %v637 = vmul.f32 %v543, %v621
  %v638 = vmul.f32 %v545, %v622
  %v639 = vmul.f32 %v547, %v623
  %v640 = vmul.f32 %v549, %v624
  %v641 = vmul.f32 %v551, %v625
  %v642 = vmul.f32 %v553, %v626
  %v643 = vmul.f32 %v555, %v627
  %v644 = vmul.f32 %v557, %v628
  %v645 = vmul.f32 %v559, %v629
  %v646 = vmul.f32 %v561, %v630
  %v647 = vmul.f32 %v563, %v631
  %v648 = vmul.f32 %v565, %v632
  %v649 = vmul.f32 %v567, %v633
  %v650 = vmul.f32 %v569, %v634
  %v651 = vmul.f32 %v571, %v635
  %v652 = vpack.c.bf16 %v637, %v636
  %v653 = vpack.c.bf16 %v639, %v638
  %v654 = vpack.c.bf16 %v641, %v640
  %v655 = vpack.c.bf16 %v643, %v642
  %v656 = vpack.c.bf16 %v645, %v644
  %v657 = vpack.c.bf16 %v647, %v646
  %v658 = vpack.c.bf16 %v649, %v648
  %v659 = vpack.c.bf16 %v651, %v650
  %660 = vrot.lane.b32.xlu0 %v197, 64
  %v661 = vpop.permute.xlu0 %660
  %662 = vrot.lane.b32.xlu0 %v198, 64
  %v663 = vpop.permute.xlu0 %662
  %664 = vrot.lane.b32.xlu0 %v199, 64
  %v665 = vpop.permute.xlu0 %664
  %666 = vrot.lane.b32.xlu0 %v200, 64
  %v667 = vpop.permute.xlu0 %666
  %v673 = vsel %vm475, %v652, 0
  %v676 = vsel %vm475, %v653, 0
  %v679 = vsel %vm475, %v654, 0
  %v682 = vsel %vm475, %v655, 0
  %684 = vmatprep.subr.bf16.mxu0 0
  %685 = vmatpush1.bf16.msra.mxu0 %v661
  %686 = vmatprep.subr.bf16.mxu0 0
  %687 = vmatpush1.bf16.msra.mxu0 %v663
  %688 = vmatprep.subr.bf16.mxu0 0
  %689 = vmatpush1.bf16.msra.mxu0 %v665
  %690 = vmatprep.subr.bf16.mxu0 0
  %691 = vmatpush1.bf16.msra.mxu0 %v667
  %692 = vmatprep.subr.bf16.mxu0 0
  %693 = vmatpush1.bf16.msra.mxu0 0
  %694 = vmatprep.subr.bf16.mxu0 0
  %695 = vmatpush1.bf16.msra.mxu0 0
  %696 = vmatprep.subr.bf16.mxu0 0
  %697 = vmatpush1.bf16.msra.mxu0 0
  %698 = vmatprep.subr.bf16.mxu0 0
  %699 = vmatpush1.bf16.msra.mxu0 0
  %700 = vmatprep.subr.bf16.mxu0 0
  %701 = vmatpush1.bf16.msra.mxu0 0
  %702 = vmatprep.subr.bf16.mxu0 0
  %703 = vmatpush1.bf16.msra.mxu0 0
  %704 = vmatprep.subr.bf16.mxu0 0
  %705 = vmatpush1.bf16.msra.mxu0 0
  %706 = vmatprep.subr.bf16.mxu0 0
  %707 = vmatpush1.bf16.msra.mxu0 0
  %708 = vmatprep.subr.bf16.mxu0 0
  %709 = vmatpush1.bf16.msra.mxu0 0
  %710 = vmatprep.subr.bf16.mxu0 0
  %711 = vmatpush1.bf16.msra.mxu0 0
  %712 = vmatprep.subr.bf16.mxu0 0
  %713 = vmatpush1.bf16.msra.mxu0 0
  %714 = vmatprep.subr.bf16.mxu0 0
  %715 = vmatpush1.bf16.msra.mxu0 0
  %716 = vmatprep.mubr.bf16.mxu0 0
  %717 = vmatmul.mubr.bf16.gmra.mrb[0].mxu0 %v673
  %v718 = vpop.f32.mrb[0].mxu0
  %v719 = vadd.f32 0.0, %v718
  %v720 = vpop.f32.mrb[0].mxu0
  %v721 = vpop.f32.mrb[0].mxu0
  %v722 = vadd.f32 0.0, %v721
  %v723 = vpop.f32.mrb[0].mxu0
  %724 = vmatprep.mubr.bf16.mxu0 0
  %725 = vmatmul.mubr.bf16.gmra.mrb[0].mxu0 %v676
  %v726 = vpop.f32.mrb[0].mxu0
  %v727 = vadd.f32 0.0, %v726
  %v728 = vpop.f32.mrb[0].mxu0
  %v729 = vpop.f32.mrb[0].mxu0
  %v730 = vadd.f32 0.0, %v729
  %v731 = vpop.f32.mrb[0].mxu0
  %732 = vmatprep.mubr.bf16.mxu0 0
  %733 = vmatmul.mubr.bf16.gmra.mrb[0].mxu0 %v679
  %v734 = vpop.f32.mrb[0].mxu0
  %v735 = vadd.f32 0.0, %v734
  %v736 = vpop.f32.mrb[0].mxu0
  %v737 = vpop.f32.mrb[0].mxu0
  %v738 = vadd.f32 0.0, %v737
  %v739 = vpop.f32.mrb[0].mxu0
  %740 = vmatprep.mubr.bf16.mxu0 0
  %741 = vmatmul.mubr.bf16.gmra.mrb[0].mxu0 %v682
  %v742 = vpop.f32.mrb[0].mxu0
  %v743 = vadd.f32 0.0, %v742
  %v744 = vpop.f32.mrb[0].mxu0
  %v745 = vpop.f32.mrb[0].mxu0
  %v746 = vadd.f32 0.0, %v745
  %v747 = vpop.f32.mrb[0].mxu0
  %748 = vdwg.mxu0
  %749 = vrot.lane.b32.xlu0 %v201, 64
  %v750 = vpop.permute.xlu0 %749
  %751 = vrot.lane.b32.xlu0 %v202, 64
  %v752 = vpop.permute.xlu0 %751
  %753 = vrot.lane.b32.xlu0 %v203, 64
  %v754 = vpop.permute.xlu0 %753
  %755 = vrot.lane.b32.xlu0 %v204, 64
  %v756 = vpop.permute.xlu0 %755
  %v762 = vsel %vm475, %v656, 0
  %v765 = vsel %vm475, %v657, 0
  %v768 = vsel %vm475, %v658, 0
  %v771 = vsel %vm475, %v659, 0
  %773 = vmatprep.subr.bf16.mxu0 0
  %774 = vmatpush1.bf16.msra.mxu0 %v750
  %775 = vmatprep.subr.bf16.mxu0 0
  %776 = vmatpush1.bf16.msra.mxu0 %v752
  %777 = vmatprep.subr.bf16.mxu0 0
  %778 = vmatpush1.bf16.msra.mxu0 %v754
  %779 = vmatprep.subr.bf16.mxu0 0
  %780 = vmatpush1.bf16.msra.mxu0 %v756
  %781 = vmatprep.subr.bf16.mxu0 0
  %782 = vmatpush1.bf16.msra.mxu0 0
  %783 = vmatprep.subr.bf16.mxu0 0
  %784 = vmatpush1.bf16.msra.mxu0 0
  %785 = vmatprep.subr.bf16.mxu0 0
  %786 = vmatpush1.bf16.msra.mxu0 0
  %787 = vmatprep.subr.bf16.mxu0 0
  %788 = vmatpush1.bf16.msra.mxu0 0
  %789 = vmatprep.subr.bf16.mxu0 0
  %790 = vmatpush1.bf16.msra.mxu0 0
  %791 = vmatprep.subr.bf16.mxu0 0
  %792 = vmatpush1.bf16.msra.mxu0 0
  %793 = vmatprep.subr.bf16.mxu0 0
  %794 = vmatpush1.bf16.msra.mxu0 0
  %795 = vmatprep.subr.bf16.mxu0 0
  %796 = vmatpush1.bf16.msra.mxu0 0
  %797 = vmatprep.subr.bf16.mxu0 0
  %798 = vmatpush1.bf16.msra.mxu0 0
  %799 = vmatprep.subr.bf16.mxu0 0
  %800 = vmatpush1.bf16.msra.mxu0 0
  %801 = vmatprep.subr.bf16.mxu0 0
  %802 = vmatpush1.bf16.msra.mxu0 0
  %803 = vmatprep.subr.bf16.mxu0 0
  %804 = vmatpush1.bf16.msra.mxu0 0
  %805 = vmatprep.mubr.bf16.mxu0 0
  %806 = vmatmul.mubr.bf16.gmra.mrb[0].mxu0 %v762
  %v807 = vpop.f32.mrb[0].mxu0
  %v808 = vadd.f32 0.0, %v807
  %v809 = vpop.f32.mrb[0].mxu0
  %v810 = vpop.f32.mrb[0].mxu0
  %v811 = vadd.f32 0.0, %v810
  %v812 = vpop.f32.mrb[0].mxu0
  %813 = vmatprep.mubr.bf16.mxu0 0
  %814 = vmatmul.mubr.bf16.gmra.mrb[0].mxu0 %v765
  %v815 = vpop.f32.mrb[0].mxu0
  %v816 = vadd.f32 0.0, %v815
  %v817 = vpop.f32.mrb[0].mxu0
  %v818 = vpop.f32.mrb[0].mxu0
  %v819 = vadd.f32 0.0, %v818
  %v820 = vpop.f32.mrb[0].mxu0
  %821 = vmatprep.mubr.bf16.mxu0 0
  %822 = vmatmul.mubr.bf16.gmra.mrb[0].mxu0 %v768
  %v823 = vpop.f32.mrb[0].mxu0
  %v824 = vadd.f32 0.0, %v823
  %v825 = vpop.f32.mrb[0].mxu0
  %v826 = vpop.f32.mrb[0].mxu0
  %v827 = vadd.f32 0.0, %v826
  %v828 = vpop.f32.mrb[0].mxu0
  %829 = vmatprep.mubr.bf16.mxu0 0
  %830 = vmatmul.mubr.bf16.gmra.mrb[0].mxu0 %v771
  %v831 = vpop.f32.mrb[0].mxu0
  %v832 = vadd.f32 0.0, %v831
  %v833 = vpop.f32.mrb[0].mxu0
  %v834 = vpop.f32.mrb[0].mxu0
  %v835 = vadd.f32 0.0, %v834
  %v836 = vpop.f32.mrb[0].mxu0
  %837 = vdwg.mxu0
  %838 = vst.msk [vmem:[%s2] sm:$0xff] %vm217, %v719
  %839 = vst.msk [vmem:[%s2 + $0x8] sm:$0xff] %vm217, %v722
  %840 = vst.msk [vmem:[%s2 + $0x10] sm:$0xff] %vm217, %v727
  %841 = vst.msk [vmem:[%s2 + $0x18] sm:$0xff] %vm217, %v730
  %842 = vst.msk [vmem:[%s2 + $0x20] sm:$0xff] %vm217, %v735
  %843 = vst.msk [vmem:[%s2 + $0x28] sm:$0xff] %vm217, %v738
  %844 = vst.msk [vmem:[%s2 + $0x30] sm:$0xff] %vm217, %v743
  %845 = vst.msk [vmem:[%s2 + $0x38] sm:$0xff] %vm217, %v746
  %846 = vst.msk [vmem:[%s2 + $0x40] sm:$0xff] %vm217, %v808
  %847 = vst.msk [vmem:[%s2 + $0x48] sm:$0xff] %vm217, %v811
  %848 = vst.msk [vmem:[%s2 + $0x50] sm:$0xff] %vm217, %v816
  %849 = vst.msk [vmem:[%s2 + $0x58] sm:$0xff] %vm217, %v819
  %850 = vst.msk [vmem:[%s2 + $0x60] sm:$0xff] %vm217, %v824
  %851 = vst.msk [vmem:[%s2 + $0x68] sm:$0xff] %vm217, %v827
  %852 = vst.msk [vmem:[%s2 + $0x70] sm:$0xff] %vm217, %v832
  %853 = vst.msk [vmem:[%s2 + $0x78] sm:$0xff] %vm217, %v835
  // Predicated region
  $region10: #{head_attention.1} parent=0 // pred_check
    _
  $region11: #{head_attention.1} parent=0 // pred_check_branch
    %855 = sbr.rel (0) target = $region13
  $region12: #{head_attention.1} parent=0 // pred_region
    _
  $region13: #{head_attention.1} parent=0 // pred_fallthru
    _
  // Predicated region
  $region14: #{head_attention.1} parent=0 // pred_check
    _
  $region15: #{head_attention.1} parent=0 // pred_check_branch
    %857 = sbr.rel (0) target = $region17
  $region16: #{head_attention.1} parent=0 // pred_region
    _
  $region17: #{head_attention.1} parent=0 // pred_fallthru
    _

</llo_original>
